<compile_context>
chip_gen: v7x
topology: tpu7x:2x2x1
jax: 0.10.0
libtpu: 0.0.40
codegen_flags: <defaults>
</compile_context>

<pallas_src>
import numpy as np
from itertools import combinations

import jax
import jax.numpy as jnp
from jax import lax
from jax.experimental import pallas as pl
from jax.experimental.pallas import tpu as pltpu

MARGIN = 0.2
EPS = 1e-12  # F.normalize eps


def _round_up(x, m):
    return ((x + m - 1) // m) * m


def _vmem_limit_bytes():
    """Generation-aware scoped-VMEM budget: ~3/4 physical, clamped to [32, 96] MiB."""
    try:
        cap = getattr(pltpu.get_tpu_info(), "vmem_capacity_bytes", None)
    except Exception:
        cap = None
    if not cap:
        cap = 64 * 1024 * 1024  # conservative (v7x per-TC VMEM)
    return int(min(max(cap * 3 // 4, 32 * 1024 * 1024), 96 * 1024 * 1024))


# ---------------------------------------------------------------------------
# Kernel A: one-shot L2 normalize + bf16 cast (pre-pass)
# ---------------------------------------------------------------------------
def _normalize_bf16_kernel(x_ref, o_ref):
    x = x_ref[...]                                    # (TR, Dp) f32
    # x / max(||x||, eps) == x * rsqrt(max(||x||^2, eps^2)); zero-padded rows -> 0.
    sq = jnp.sum(x * x, axis=1, keepdims=True)        # (TR, 1)
    inv = lax.rsqrt(jnp.maximum(sq, EPS * EPS))
    o_ref[...] = (x * inv).astype(o_ref.dtype)        # bf16 MXU operand


def _normalize_bf16(x_p, tr, vmem_limit):
    Np, Dp = x_p.shape
    return pl.pallas_call(
        _normalize_bf16_kernel,
        out_shape=jax.ShapeDtypeStruct((Np, Dp), jnp.bfloat16),
        grid=(Np // tr,),
        in_specs=[pl.BlockSpec((tr, Dp), lambda i: (i, 0))],
        out_specs=pl.BlockSpec((tr, Dp), lambda i: (i, 0)),
        compiler_params=pltpu.CompilerParams(
            dimension_semantics=("parallel",),
            vmem_limit_bytes=vmem_limit),
    )(x_p)


# ---------------------------------------------------------------------------
# Kernel B: pairwise squared distances of unit vectors via 2 - 2 * (X @ X.T)
# ---------------------------------------------------------------------------
def _pdist_kernel(xr_ref, xc_ref, o_ref):
    # bf16 operands, f32 accumulation on the MXU; contraction on D, no transpose.
    dot = lax.dot_general(
        xr_ref[...], xc_ref[...],
        dimension_numbers=(((1,), (1,)), ((), ())),
        preferred_element_type=jnp.float32)
    # Unit vectors: ||a-b||^2 = 2 - 2*a.b ; clamp tiny negatives on the diagonal.
    o_ref[...] = jnp.maximum(2.0 - 2.0 * dot, 0.0)


def _pdist_kernel_kblocked(xr_ref, xc_ref, o_ref, acc_ref):
    @pl.when(pl.program_id(2) == 0)
    def _():
        acc_ref[...] = jnp.zeros_like(acc_ref)

    acc_ref[...] += lax.dot_general(
        xr_ref[...], xc_ref[...],
        dimension_numbers=(((1,), (1,)), ((), ())),
        preferred_element_type=jnp.float32)

    @pl.when(pl.program_id(2) == pl.num_programs(2) - 1)
    def _():
        o_ref[...] = jnp.maximum(2.0 - 2.0 * acc_ref[...], 0.0)


def normalized_pairwise_sq_dist(x, tile=512, k_cap=2048):
    """dist[i,j] = ||normalize(x[i]) - normalize(x[j])||^2.

    Returns the PADDED (Np, Np) f32 matrix; rows/cols >= N correspond to zero
    padding and callers only index entries < N.
    """
    N, D = x.shape
    # Tile edge: 512 for large N (higher arithmetic intensity); small N padded
    # up to at least 128 so the output last dim is lane-dense (no masked vst).
    TM = tile if N > tile else _round_up(max(N, 1), 128)
    Np = _round_up(N, TM)
    Dp = _round_up(D, 128)
    if Dp > k_cap:                       # K-block very large feature dims
        Dp = _round_up(Dp, k_cap)
        TK = k_cap
    else:
        TK = Dp
    nk = Dp // TK
    vmem_limit = _vmem_limit_bytes()

    # Single cheap cast+zero-pad feeding the normalize pre-pass (zero padding is
    # norm/dot neutral).
    x_p = jnp.pad(x.astype(jnp.float32), ((0, Np - N), (0, Dp - D)))

    # Kernel A: normalize + bf16 cast once (not per pdist grid step).
    tr = TM
    while tr > 128 and 12 * tr * Dp > (vmem_limit // 2):
        tr //= 2
    xn = _normalize_bf16(x_p, tr, vmem_limit)

    # Kernel B: tiled pairwise squared distances on the MXU.
    # TODO(synk): exploit dist symmetry (upper-triangular block grid) once N is
    # large enough that this kernel, not host mining, dominates wall clock.
    if nk == 1:
        dist = pl.pallas_call(
            _pdist_kernel,
            out_shape=jax.ShapeDtypeStruct((Np, Np), jnp.float32),
            grid=(Np // TM, Np // TM),
            in_specs=[pl.BlockSpec((TM, Dp), lambda i, j: (i, 0)),   # row tile
                      pl.BlockSpec((TM, Dp), lambda i, j: (j, 0))],  # col tile
            out_specs=pl.BlockSpec((TM, TM), lambda i, j: (i, j)),
            compiler_params=pltpu.CompilerParams(
                dimension_semantics=("parallel", "parallel"),
                vmem_limit_bytes=vmem_limit),
        )(xn, xn)
    else:
        dist = pl.pallas_call(
            _pdist_kernel_kblocked,
            out_shape=jax.ShapeDtypeStruct((Np, Np), jnp.float32),
            grid=(Np // TM, Np // TM, nk),
            in_specs=[pl.BlockSpec((TM, TK), lambda i, j, k: (i, k)),
                      pl.BlockSpec((TM, TK), lambda i, j, k: (j, k))],
            out_specs=pl.BlockSpec((TM, TM), lambda i, j, k: (i, j)),
            scratch_shapes=[pltpu.VMEM((TM, TM), jnp.float32)],
            compiler_params=pltpu.CompilerParams(
                dimension_semantics=("parallel", "parallel", "arbitrary"),
                vmem_limit_bytes=vmem_limit),
        )(xn, xn)
    return dist


# ---------------------------------------------------------------------------
# Host-side triplet mining (RandomNegativeTripletSelector, is_distance=True)
# ---------------------------------------------------------------------------
# TODO(synk): data-dependent, RNG-driven, variable-length mining has no clean
# static-shape Pallas equivalent; it runs on host with a seeded numpy RNG
# (torch RNG parity is not reproduced). is_distance=False branch not implemented.
def get_triplets_random_negative(dist_np, labels_np, margin, rng):
    triplets = []
    last_anchor_positive = None
    last_negative_indices = None
    for label in sorted(set(labels_np.tolist())):
        label_mask = labels_np == label
        label_indices = np.where(label_mask)[0]
        if len(label_indices) < 2:
            continue
        negative_indices = np.where(~label_mask)[0]
        anchor_positives = np.array(list(combinations(label_indices, 2)))
        ap_distances = dist_np[anchor_positives[:, 0], anchor_positives[:, 1]]
        for anchor_positive, ap_distance in zip(anchor_positives, ap_distances):
            last_anchor_positive = anchor_positive
            last_negative_indices = negative_indices
            if len(negative_indices) == 0:
                continue
            loss_values = (
                ap_distance - dist_np[anchor_positive[0], negative_indices] + margin
            )
            hard = np.where(loss_values > 0)[0]
            if len(hard) > 0:
                hard_negative = negative_indices[rng.choice(hard)]
                triplets.append(
                    [int(anchor_positive[0]), int(anchor_positive[1]), int(hard_negative)]
                )
    if len(triplets) == 0:
        # Guarded fallback (original code could dereference None here).
        if last_anchor_positive is not None and last_negative_indices is not None \
                and len(last_negative_indices) > 0:
            triplets.append([int(last_anchor_positive[0]),
                             int(last_anchor_positive[1]),
                             int(last_negative_indices[0])])
        else:
            n = len(labels_np)
            triplets.append([0, 0, min(1, n - 1)])
    return np.asarray(triplets, dtype=np.int32)


# ---------------------------------------------------------------------------
# Full forward (mirrors OnlineTripletLoss.forward, is_distance=True)
# ---------------------------------------------------------------------------
def online_triplet_loss(embeddings, target, margin=MARGIN, seed=0,
                        return_triplets=False):
    N = embeddings.shape[0]
    dist = normalized_pairwise_sq_dist(embeddings)        # (Np, Np) f32, padded

    # TODO(synk): synchronous device->host transfer + Python mining dominate
    # end-to-end latency at realistic batch sizes; on-device mining with a fixed
    # max-triplet cap + validity mask (indices scalar-prefetched into the gather)
    # would remove this sync.
    dist_np = np.asarray(jax.device_get(dist))[:N, :N]    # host-side view, no device copy
    labels_np = np.asarray(jax.device_get(target))
    rng = np.random.RandomState(seed)
    triplets = get_triplets_random_negative(dist_np, labels_np, margin, rng)

    # Loss entries are exactly entries of the distance matrix the kernel already
    # produced: relu(dist[a,p] - dist[a,n] + margin).  All triplet indices are
    # < N, so gathering straight from the padded matrix is safe (no slice copy).
    idx = jnp.asarray(triplets)                           # (T, 3)
    ap = dist[idx[:, 0], idx[:, 1]]
    an = dist[idx[:, 0], idx[:, 2]]
    losses = jnp.maximum(ap - an + margin, 0.0)
    mean_loss = jnp.mean(losses)

    if return_triplets:
        return mean_loss, int(triplets.shape[0]), triplets
    return mean_loss, int(triplets.shape[0])


if __name__ == "__main__":
    key = jax.random.PRNGKey(0)
    N, D = 16, 32
    embeddings = jax.random.normal(key, (N, D), dtype=jnp.float32)
    target = jnp.array([0, 0, 0, 0, 1, 1, 1, 1, 2, 2, 2, 2, 3, 3, 3, 3],
                       dtype=jnp.int32)

    mean_loss, n_triplets, triplets = online_triplet_loss(
        embeddings, target, return_triplets=True)
    mean_loss = jax.block_until_ready(mean_loss)

    # Pure-JAX f32 reference of the PyTorch forward, using the same mined triplets.
    emb_ref = embeddings / jnp.maximum(
        jnp.linalg.norm(embeddings, axis=1, keepdims=True), EPS)
    a = emb_ref[triplets[:, 0]]
    p = emb_ref[triplets[:, 1]]
    n = emb_ref[triplets[:, 2]]
    ap_ref = jnp.sum((a - p) ** 2, axis=1)
    an_ref = jnp.sum((a - n) ** 2, axis=1)
    ref_loss = jnp.mean(jnp.maximum(ap_ref - an_ref + MARGIN, 0.0))

    assert n_triplets >= 1
    assert bool(jnp.isfinite(mean_loss)) and float(mean_loss) >= 0.0
    # bf16 MXU operands introduce ~1e-3-level error per distance entry, so the
    # tolerance vs. the f32 reference is loosened accordingly.
    assert jnp.allclose(mean_loss, ref_loss, atol=2e-2), (float(mean_loss),
                                                          float(ref_loss))
    print("KERNEL_OK")
</pallas_src>

<mosaic_0001>
module attributes {stable_mosaic.version = 11 : i64} {
  func.func @_normalize_bf16_kernel(%arg0: i32, %arg1: memref<128x128xf32, #tpu.memory_space<vmem>>, %arg2: memref<128x128xbf16, #tpu.memory_space<vmem>>) attributes {dimension_semantics = [#tpu.dimension_semantics<parallel>], iteration_bounds = array<i64: 1>, scalar_prefetch = 0 : i64, scratch_operands = 0 : i64, tpu.core_type = #tpu.core_type<tc>, window_params = [{transform_indices = @transform_0, window_bounds = array<i64: 128, 128>}, {transform_indices = @transform_1, window_bounds = array<i64: 128, 128>}]} {
    %c0 = arith.constant 0 : index
    %c0_0 = arith.constant 0 : index
    %0 = vector.load %arg1[%c0, %c0_0] : memref<128x128xf32, #tpu.memory_space<vmem>>, vector<128x128xf32>
    %1 = arith.mulf %0, %0 : vector<128x128xf32>
    %cst = arith.constant dense<0.000000e+00> : vector<128xf32>
    %2 = vector.multi_reduction <add>, %1, %cst [1] : vector<128x128xf32> to vector<128xf32>
    %3 = vector.shape_cast %2 : vector<128xf32> to vector<128x1xf32>
    %cst_1 = arith.constant 1.000000e-24 : f32
    %4 = vector.broadcast %cst_1 : f32 to vector<128x1xf32>
    %5 = arith.maximumf %3, %4 : vector<128x1xf32>
    %6 = math.rsqrt %5 : vector<128x1xf32>
    %7 = vector.broadcast %6 : vector<128x1xf32> to vector<128x128xf32>
    %8 = arith.mulf %0, %7 : vector<128x128xf32>
    %9 = arith.truncf %8 : vector<128x128xf32> to vector<128x128xbf16>
    %c0_2 = arith.constant 0 : index
    %c0_3 = arith.constant 0 : index
    %10 = vector.load %arg2[%c0_2, %c0_3] : memref<128x128xbf16, #tpu.memory_space<vmem>>, vector<128x128xbf16>
    tpu.vector_store %arg2[%c0_2, %c0_3], %9 {strides = array<i32>} : memref<128x128xbf16, #tpu.memory_space<vmem>>, vector<128x128xbf16>,
    return
  }
  func.func @transform_0(%arg0: i32) -> (i32, i32) {
    %c0_i32 = arith.constant 0 : i32
    %c0_i32_0 = arith.constant 0 : i32
    return %arg0, %c0_i32 : i32, i32
  }
  func.func @transform_1(%arg0: i32) -> (i32, i32) {
    %c0_i32 = arith.constant 0 : i32
    %c0_i32_0 = arith.constant 0 : i32
    return %arg0, %c0_i32 : i32, i32
  }
}

</mosaic_0001>

<llo_original>
// kernel: tpu_custom_call.1
$region0: #{tpu_custom_call.1}
  #allocation0 [shape = 'u32[]', space=smem, size = 0x4, offset = 0x4, fixed_abs, tag = 'smem constant byte address 0x4 - core index']
  #allocation1 [shape = 'u32[144,128]{1,0:T(1,128)}', space=vmem, size = 0x12000, scoped, tag = 'internal scratch']
  %s0 = inlined_call_operand.hbm [shape: f32[128,128], index: 0, kind: input, shape index: {}]
  %s1 = inlined_call_operand.hbm [shape: bf16[128,128], index: 1, kind: output, shape index: {}]
  %s2 = sld [smem:[#allocation0]]
  $region18: #{tpu_custom_call.1} parent=0
    _
  %s4 = ssub.s32 1, %s2
  %s5 = scalar_select 0, %s4, %s2
  $region1: #{tpu_custom_call.1} parent=0
    #allocation2 [shape = 'u8[65536]{0}', space=vmem, size = 0x10000, scoped, tag = 'input window, operand 0, single buffered']
    #allocation3 [shape = 's32[1]{0}', space=sflag, size = 0x4, scoped, tag = 'scoped memory for tpu_custom_call.1']
    #allocation4 [shape = 's32[1]{0}', space=sflag, size = 0x4, scoped, tag = 'scoped memory for tpu_custom_call.1']
    #allocation5 [shape = 'u8[32768]{0}', space=vmem, size = 0x8000, scoped, tag = 'output window, operand 0, single buffered']
    %6 = vsyncpa [#allocation3], 0
    %7 = vsyncpa [#allocation4], 0
    // Predicated region
    $region2: #{tpu_custom_call.1} parent=1 // pred_check
      _
    $region3: #{tpu_custom_call.1} parent=1 // pred_check_branch
      %9 = sbr.rel (0) target = $region5
    $region4: #{tpu_custom_call.1} parent=1 // pred_region
      %s11 = ssub.s32 2048, 2048
      %12 = vsyncadd [#allocation3], %s11
      %s13 = sshll.u32 [#allocation2], 4
      %s14 = int_to_ptr.vmem [resolvable:$true] %s13
      %19 = dma.hbm_to_vmem [thread:$0]  %s0, 2048, %s14, [#allocation3], 128, 128, 8
    $region5: #{tpu_custom_call.1} parent=1 // pred_fallthru
      _
    // Predicated region
    $region6: #{tpu_custom_call.1} parent=1 // pred_check
      _
    $region7: #{tpu_custom_call.1} parent=1 // pred_check_branch
      %21 = sbr.rel (0) target = $region9
    $region8: #{tpu_custom_call.1} parent=1 // pred_region
      %22 = dma.done [#allocation3], 2048
    $region9: #{tpu_custom_call.1} parent=1 // pred_fallthru
      _
    %v23 = vld [vmem:[#allocation2] sm:$0xff]
    %v24 = vld [vmem:[#allocation2 + $0x8] sm:$0xff]
    %v25 = vld [vmem:[#allocation2 + $0x10] sm:$0xff]
    %v26 = vld [vmem:[#allocation2 + $0x18] sm:$0xff]
    %v27 = vld [vmem:[#allocation2 + $0x20] sm:$0xff]
    %v28 = vld [vmem:[#allocation2 + $0x28] sm:$0xff]
    %v29 = vld [vmem:[#allocation2 + $0x30] sm:$0xff]
    %v30 = vld [vmem:[#allocation2 + $0x38] sm:$0xff]
    %v31 = vld [vmem:[#allocation2 + $0x40] sm:$0xff]
    %v32 = vld [vmem:[#allocation2 + $0x48] sm:$0xff]
    %v33 = vld [vmem:[#allocation2 + $0x50] sm:$0xff]
    %v34 = vld [vmem:[#allocation2 + $0x58] sm:$0xff]
    %v35 = vld [vmem:[#allocation2 + $0x60] sm:$0xff]
    %v36 = vld [vmem:[#allocation2 + $0x68] sm:$0xff]
    %v37 = vld [vmem:[#allocation2 + $0x70] sm:$0xff]
    %v38 = vld [vmem:[#allocation2 + $0x78] sm:$0xff]
    %v39 = vmul.f32 %v23, %v23
    %v40 = vmul.f32 %v24, %v24
    %v41 = vmul.f32 %v25, %v25
    %v42 = vmul.f32 %v26, %v26
    %v43 = vmul.f32 %v27, %v27
    %v44 = vmul.f32 %v28, %v28
    %v45 = vmul.f32 %v29, %v29
    %v46 = vmul.f32 %v30, %v30
    %v47 = vmul.f32 %v31, %v31
    %v48 = vmul.f32 %v32, %v32
    %v49 = vmul.f32 %v33, %v33
    %v50 = vmul.f32 %v34, %v34
    %v51 = vmul.f32 %v35, %v35
    %v52 = vmul.f32 %v36, %v36
    %v53 = vmul.f32 %v37, %v37
    %v54 = vmul.f32 %v38, %v38
    %55 = vadd.xlane.f32.xlu0 %v39
    %v56 = vpop.xlane.xlu0 %55
    %57 = vadd.xlane.f32.xlu0 %v40
    %v58 = vpop.xlane.xlu0 %57
    %59 = vadd.xlane.f32.xlu0 %v41
    %v60 = vpop.xlane.xlu0 %59
    %61 = vadd.xlane.f32.xlu0 %v42
    %v62 = vpop.xlane.xlu0 %61
    %63 = vadd.xlane.f32.xlu0 %v43
    %v64 = vpop.xlane.xlu0 %63
    %65 = vadd.xlane.f32.xlu0 %v44
    %v66 = vpop.xlane.xlu0 %65
    %67 = vadd.xlane.f32.xlu0 %v45
    %v68 = vpop.xlane.xlu0 %67
    %69 = vadd.xlane.f32.xlu0 %v46
    %v70 = vpop.xlane.xlu0 %69
    %71 = vadd.xlane.f32.xlu0 %v47
    %v72 = vpop.xlane.xlu0 %71
    %73 = vadd.xlane.f32.xlu0 %v48
    %v74 = vpop.xlane.xlu0 %73
    %75 = vadd.xlane.f32.xlu0 %v49
    %v76 = vpop.xlane.xlu0 %75
    %77 = vadd.xlane.f32.xlu0 %v50
    %v78 = vpop.xlane.xlu0 %77
    %79 = vadd.xlane.f32.xlu0 %v51
    %v80 = vpop.xlane.xlu0 %79
    %81 = vadd.xlane.f32.xlu0 %v52
    %v82 = vpop.xlane.xlu0 %81
    %83 = vadd.xlane.f32.xlu0 %v53
    %v84 = vpop.xlane.xlu0 %83
    %85 = vadd.xlane.f32.xlu0 %v54
    %v86 = vpop.xlane.xlu0 %85
    %v87 = vmax.f32 %v56, 1e-24
    %v88 = vmax.f32 %v58, 1e-24
    %v89 = vmax.f32 %v60, 1e-24
    %v90 = vmax.f32 %v62, 1e-24
    %v91 = vmax.f32 %v64, 1e-24
    %v92 = vmax.f32 %v66, 1e-24
    %v93 = vmax.f32 %v68, 1e-24
    %v94 = vmax.f32 %v70, 1e-24
    %v95 = vmax.f32 %v72, 1e-24
    %v96 = vmax.f32 %v74, 1e-24
    %v97 = vmax.f32 %v76, 1e-24
    %v98 = vmax.f32 %v78, 1e-24
    %v99 = vmax.f32 %v80, 1e-24
    %v100 = vmax.f32 %v82, 1e-24
    %v101 = vmax.f32 %v84, 1e-24
    %v102 = vmax.f32 %v86, 1e-24
    %v103 = vrsqrt.pop %v87
    %v104 = vrsqrt.pop %v88
    %v105 = vrsqrt.pop %v89
    %v106 = vrsqrt.pop %v90
    %v107 = vrsqrt.pop %v91
    %v108 = vrsqrt.pop %v92
    %v109 = vrsqrt.pop %v93
    %v110 = vrsqrt.pop %v94
    %v111 = vrsqrt.pop %v95
    %v112 = vrsqrt.pop %v96
    %v113 = vrsqrt.pop %v97
    %v114 = vrsqrt.pop %v98
    %v115 = vrsqrt.pop %v99
    %v116 = vrsqrt.pop %v100
    %v117 = vrsqrt.pop %v101
    %v118 = vrsqrt.pop %v102
    %v119 = vmul.f32 %v23, %v103
    %v120 = vmul.f32 %v24, %v104
    %v121 = vmul.f32 %v25, %v105
    %v122 = vmul.f32 %v26, %v106
    %v123 = vmul.f32 %v27, %v107
    %v124 = vmul.f32 %v28, %v108
    %v125 = vmul.f32 %v29, %v109
    %v126 = vmul.f32 %v30, %v110
    %v127 = vmul.f32 %v31, %v111
    %v128 = vmul.f32 %v32, %v112
    %v129 = vmul.f32 %v33, %v113
    %v130 = vmul.f32 %v34, %v114
    %v131 = vmul.f32 %v35, %v115
    %v132 = vmul.f32 %v36, %v116
    %v133 = vmul.f32 %v37, %v117
    %v134 = vmul.f32 %v38, %v118
    %v135 = vpack.c.bf16 %v120, %v119
    %v136 = vpack.c.bf16 %v122, %v121
    %v137 = vpack.c.bf16 %v124, %v123
    %v138 = vpack.c.bf16 %v126, %v125
    %v139 = vpack.c.bf16 %v128, %v127
    %v140 = vpack.c.bf16 %v130, %v129
    %v141 = vpack.c.bf16 %v132, %v131
    %v142 = vpack.c.bf16 %v134, %v133
    %v151 = vunpack.c.l.b16 %v135
    %v152 = vunpack.c.h.b16 %v135
    %v153 = vunpack.c.l.b16 %v136
    %v154 = vunpack.c.h.b16 %v136
    %v155 = vunpack.c.l.b16 %v137
    %v156 = vunpack.c.h.b16 %v137
    %v157 = vunpack.c.l.b16 %v138
    %v158 = vunpack.c.h.b16 %v138
    %v159 = vunpack.c.l.b16 %v139
    %v160 = vunpack.c.h.b16 %v139
    %v161 = vunpack.c.l.b16 %v140
    %v162 = vunpack.c.h.b16 %v140
    %v163 = vunpack.c.l.b16 %v141
    %v164 = vunpack.c.h.b16 %v141
    %v165 = vunpack.c.l.b16 %v142
    %v166 = vunpack.c.h.b16 %v142
    %v167 = vpack.c.b16 %v151, %v151
    %v168 = vpack.c.b16 %v152, %v152
    %v169 = vpack.c.b16 %v153, %v153
    %v170 = vpack.c.b16 %v154, %v154
    %v171 = vpack.c.b16 %v155, %v155
    %v172 = vpack.c.b16 %v156, %v156
    %v173 = vpack.c.b16 %v157, %v157
    %v174 = vpack.c.b16 %v158, %v158
    %v175 = vpack.c.b16 %v159, %v159
    %v176 = vpack.c.b16 %v160, %v160
    %v177 = vpack.c.b16 %v161, %v161
    %v178 = vpack.c.b16 %v162, %v162
    %v179 = vpack.c.b16 %v163, %v163
    %v180 = vpack.c.b16 %v164, %v164
    %v181 = vpack.c.b16 %v165, %v165
    %v182 = vpack.c.b16 %v166, %v166
    %199 = vst [vmem:[#allocation5] sm:$0xf] %v167
    %200 = vst [vmem:[#allocation5 + $0x4] sm:$0xf] %v168
    %201 = vst [vmem:[#allocation5 + $0x8] sm:$0xf] %v169
    %202 = vst [vmem:[#allocation5 + $0xc] sm:$0xf] %v170
    %203 = vst [vmem:[#allocation5 + $0x10] sm:$0xf] %v171
    %204 = vst [vmem:[#allocation5 + $0x14] sm:$0xf] %v172
    %205 = vst [vmem:[#allocation5 + $0x18] sm:$0xf] %v173
    %206 = vst [vmem:[#allocation5 + $0x1c] sm:$0xf] %v174
    %207 = vst [vmem:[#allocation5 + $0x20] sm:$0xf] %v175
    %208 = vst [vmem:[#allocation5 + $0x24] sm:$0xf] %v176
    %209 = vst [vmem:[#allocation5 + $0x28] sm:$0xf] %v177
    %210 = vst [vmem:[#allocation5 + $0x2c] sm:$0xf] %v178
    %211 = vst [vmem:[#allocation5 + $0x30] sm:$0xf] %v179
    %212 = vst [vmem:[#allocation5 + $0x34] sm:$0xf] %v180
    %213 = vst [vmem:[#allocation5 + $0x38] sm:$0xf] %v181
    %214 = vst [vmem:[#allocation5 + $0x3c] sm:$0xf] %v182
    // Predicated region
    $region10: #{tpu_custom_call.1} parent=1 // pred_check
      _
    $region11: #{tpu_custom_call.1} parent=1 // pred_check_branch
      %216 = sbr.rel (0) target = $region13
    $region12: #{tpu_custom_call.1} parent=1 // pred_region
      %s218 = ssub.s32 1024, 1024
      %219 = vsyncadd [#allocation4], %s218
      %s220 = sshll.u32 [#allocation5], 4
      %s221 = int_to_ptr.vmem [resolvable:$true] %s220
      %226 = dma.vmem_to_hbm [thread:$0]  %s221, 1024, %s1, [#allocation4], 64, 64, 4
    $region13: #{tpu_custom_call.1} parent=1 // pred_fallthru
      _
    // Predicated region
    $region14: #{tpu_custom_call.1} parent=1 // pred_check
      _
    $region15: #{tpu_custom_call.1} parent=1 // pred_check_branch
      %228 = sbr.rel (0) target = $region17
    $region16: #{tpu_custom_call.1} parent=1 // pred_region
      %229 = dma.done [#allocation4], 1024
    $region17: #{tpu_custom_call.1} parent=1 // pred_fallthru
      _
    %230 = vsyncpa [#allocation3], 1
    %231 = vsyncpa [#allocation4], 1

</llo_original>
